<compile_context>
chip_gen: v7x
topology: tpu7x:2x2x1
jax: 0.10.0
libtpu: 0.0.40
codegen_flags: <defaults>
</compile_context>

<pallas_src>
import functools
import math

import jax
import jax.numpy as jnp
from jax.experimental import pallas as pl
from jax.experimental.pallas import tpu as pltpu


# ---------------------------------------------------------------------------
# small helpers
# ---------------------------------------------------------------------------

def _round_up(x, m):
    return ((x + m - 1) // m) * m


def _fold_bn(gamma, beta, mean, var, eps=1e-5):
    """Eval-mode BatchNorm -> per-channel (scale, shift)."""
    scale = gamma / jnp.sqrt(var + eps)
    shift = beta - mean * scale
    return scale, shift


# ---------------------------------------------------------------------------
# Kernel 1: fused conv3x3 (+folded BN bias, +ReLU) as a tiled MXU matmul
#           bf16 operands, f32 VMEM accumulator, bf16 output
# ---------------------------------------------------------------------------

def _matmul_bias_act_kernel(x_ref, w_ref, b_ref, o_ref, acc_ref, *, relu):
    k = pl.program_id(2)

    @pl.when(k == 0)
    def _():
        acc_ref[...] = jnp.zeros_like(acc_ref)

    acc_ref[...] += jnp.dot(
        x_ref[...], w_ref[...], preferred_element_type=jnp.float32
    )

    @pl.when(k == pl.num_programs(2) - 1)
    def _():
        y = acc_ref[...] + b_ref[...]          # bias block is (1, tn), broadcast
        if relu:
            y = jnp.maximum(y, 0.0)
        o_ref[...] = y.astype(o_ref.dtype)


def _pick_tn(N):
    if N <= 512:
        return N
    for cand in (512, 256, 128):
        if N % cand == 0:
            return cand
    return N  # Cnn14 never hits this; small-N fallback


def _tiled_matmul_bias_act(patches, w2d, bias, *, relu=True,
                           out_dtype=jnp.bfloat16):
    """patches: (M, K), w2d: (K, N), bias: (N,) -> relu(patches@w2d + b) bf16."""
    M, K = patches.shape
    K2, N = w2d.shape
    assert K == K2

    tk_max = 4608
    if K <= tk_max:
        tk, Kp = K, K
    else:
        tk = tk_max
        Kp = _round_up(K, tk)

    # Deep layers (big K*N, small M): larger tm halves weight re-streaming.
    tm_cap = 512 if K >= tk_max else 256
    tm = min(tm_cap, _round_up(M, 8))
    Mp = _round_up(M, tm)

    tn = _pick_tn(N)
    assert N % tn == 0

    patches = patches.astype(jnp.bfloat16)
    w2d = w2d.astype(jnp.bfloat16)
    if Mp != M or Kp != K:
        patches = jnp.pad(patches, ((0, Mp - M), (0, Kp - K)))
    if Kp != K:
        w2d = jnp.pad(w2d, ((0, Kp - K), (0, 0)))
    bias2d = bias.reshape(1, N).astype(jnp.float32)

    grid = (Mp // tm, N // tn, Kp // tk)

    out = pl.pallas_call(
        functools.partial(_matmul_bias_act_kernel, relu=relu),
        out_shape=jax.ShapeDtypeStruct((Mp, N), out_dtype),
        grid=grid,
        in_specs=[
            pl.BlockSpec((tm, tk), lambda i, j, k: (i, k)),
            pl.BlockSpec((tk, tn), lambda i, j, k: (k, j)),
            pl.BlockSpec((1, tn), lambda i, j, k: (0, j)),
        ],
        out_specs=pl.BlockSpec((tm, tn), lambda i, j, k: (i, j)),
        scratch_shapes=[pltpu.VMEM((tm, tn), jnp.float32)],
        compiler_params=pltpu.CompilerParams(
            dimension_semantics=("parallel", "parallel", "arbitrary"),
            vmem_limit_bytes=32 * 1024 * 1024,
        ),
    )(patches, w2d, bias2d)
    return out[:M]


def conv3x3_bn_relu(x, w, bias, *, relu=True):
    """x: (B, H, W, Cin) NHWC; w: (3,3,Cin,Cout) with BN scale folded in;
    bias: (Cout,) folded BN shift.  Stride 1, pad 1 (SAME).  Output bf16."""
    B, H, W, Cin = x.shape
    kh, kw, wcin, Cout = w.shape
    assert (kh, kw) == (3, 3) and wcin == Cin

    x = x.astype(jnp.bfloat16)
    xp = jnp.pad(x, ((0, 0), (1, 1), (1, 1), (0, 0)))
    taps = [xp[:, dy:dy + H, dx:dx + W, :] for dy in range(3) for dx in range(3)]
    patches = jnp.concatenate(taps, axis=-1).reshape(B * H * W, 9 * Cin)
    w2d = w.reshape(9 * Cin, Cout)

    y = _tiled_matmul_bias_act(patches, w2d, bias, relu=relu)
    return y.reshape(B, H, W, Cout)


# ---------------------------------------------------------------------------
# Kernel 2: 2x2 average pooling (lane-dense, no wrapper transpose)
# ---------------------------------------------------------------------------

def _avgpool_kernel(x_ref, o_ref):
    # x_ref: (tp, 2, Wo, 2, C) -> o_ref: (tp, Wo, C)
    s = jnp.sum(x_ref[...].astype(jnp.float32), axis=(1, 3))
    o_ref[...] = (s * 0.25).astype(o_ref.dtype)


def avg_pool_2x2(x):
    """x: (B, H, W, C) -> (B, H//2, W//2, C) bf16 (floors odd dims like torch)."""
    B, H, W, C = x.shape
    Ho, Wo = H // 2, W // 2
    x = x[:, :2 * Ho, :2 * Wo, :]                     # trailing odd row/col drop
    xr = x.reshape(B * Ho, 2, Wo, 2, C)               # pure reshape, no copy
    P = B * Ho
    row_bytes = 2 * Wo * 2 * C * x.dtype.itemsize
    tp = max(1, min(P, (2 * 1024 * 1024) // row_bytes))   # byte-capped tile
    Pp = _round_up(P, tp)
    if Pp != P:
        xr = jnp.pad(xr, ((0, Pp - P), (0, 0), (0, 0), (0, 0), (0, 0)))

    out = pl.pallas_call(
        _avgpool_kernel,
        out_shape=jax.ShapeDtypeStruct((Pp, Wo, C), jnp.bfloat16),
        grid=(Pp // tp,),
        in_specs=[pl.BlockSpec((tp, 2, Wo, 2, C), lambda i: (i, 0, 0, 0, 0))],
        out_specs=pl.BlockSpec((tp, Wo, C), lambda i: (i, 0, 0)),
        compiler_params=pltpu.CompilerParams(dimension_semantics=("parallel",)),
    )(xr)
    return out[:P].reshape(B, Ho, Wo, C)


# ---------------------------------------------------------------------------
# Kernel 3: bn0 (eval BatchNorm2d over mel axis) as a tiled per-mel affine
# ---------------------------------------------------------------------------

def _bn0_kernel(x_ref, s_ref, b_ref, o_ref):
    o_ref[...] = (x_ref[...] * s_ref[...] + b_ref[...]).astype(o_ref.dtype)


def bn0_apply(x, scale, shift):
    """x: (B, T, M) f32 -> (B, T, M) bf16; per-mel-bin affine."""
    B, T, M = x.shape
    rows = B * T
    x2 = x.reshape(rows, M).astype(jnp.float32)
    tr = min(512, _round_up(rows, 8))
    rows_p = _round_up(rows, tr)
    if rows_p != rows:
        x2 = jnp.pad(x2, ((0, rows_p - rows), (0, 0)))

    out = pl.pallas_call(
        _bn0_kernel,
        out_shape=jax.ShapeDtypeStruct((rows_p, M), jnp.bfloat16),
        grid=(rows_p // tr,),
        in_specs=[
            pl.BlockSpec((tr, M), lambda i: (i, 0)),
            pl.BlockSpec((1, M), lambda i: (0, 0)),
            pl.BlockSpec((1, M), lambda i: (0, 0)),
        ],
        out_specs=pl.BlockSpec((tr, M), lambda i: (i, 0)),
        compiler_params=pltpu.CompilerParams(dimension_semantics=("parallel",)),
    )(x2, scale.reshape(1, M).astype(jnp.float32),
      shift.reshape(1, M).astype(jnp.float32))
    return out[:rows].reshape(B, T, M)


# ---------------------------------------------------------------------------
# Kernel 4: head — mean over mel, then max+mean over time (per-batch tiles)
# ---------------------------------------------------------------------------

def _head_kernel(x_ref, o_ref):
    # x_ref: (1, T, Mel, C)
    x = x_ref[...].astype(jnp.float32)
    t = jnp.mean(x, axis=2)                                   # (1, T, C)
    o_ref[...] = (jnp.max(t, axis=1) + jnp.mean(t, axis=1))[:, None, :]


def head_pool(x):
    B, T, M, C = x.shape
    out = pl.pallas_call(
        _head_kernel,
        out_shape=jax.ShapeDtypeStruct((B, 1, C), jnp.float32),
        grid=(B,),
        in_specs=[pl.BlockSpec((1, T, M, C), lambda b: (b, 0, 0, 0))],
        out_specs=pl.BlockSpec((1, 1, C), lambda b: (b, 0, 0)),
        compiler_params=pltpu.CompilerParams(dimension_semantics=("parallel",)),
    )(x)
    return out.reshape(B, C)


# ---------------------------------------------------------------------------
# Cnn14 parameters + forward
# ---------------------------------------------------------------------------

_CNN14_CHANNELS = ((1, 64), (64, 128), (128, 256), (256, 512), (512, 1024),
                   (1024, 2048))


def _xavier_uniform(key, shape):
    kh, kw, cin, cout = shape
    fan_in = kh * kw * cin
    fan_out = kh * kw * cout
    bound = math.sqrt(6.0 / (fan_in + fan_out))
    return jax.random.uniform(key, shape, jnp.float32, -bound, bound)


def _init_bn_params(c):
    # matches init_bn(): weight=1, bias=0; fresh running stats mean=0, var=1
    return dict(gamma=jnp.ones((c,), jnp.float32),
                beta=jnp.zeros((c,), jnp.float32),
                mean=jnp.zeros((c,), jnp.float32),
                var=jnp.ones((c,), jnp.float32))


def init_cnn14_params(key, mel_bins=64):
    params = {"bn0": _init_bn_params(mel_bins), "blocks": []}
    for cin, cout in _CNN14_CHANNELS:
        key, k1, k2 = jax.random.split(key, 3)
        params["blocks"].append(dict(
            w1=_xavier_uniform(k1, (3, 3, cin, cout)),
            bn1=_init_bn_params(cout),
            w2=_xavier_uniform(k2, (3, 3, cout, cout)),
            bn2=_init_bn_params(cout),
        ))
    return params


def cnn14_forward(params, logmel):
    """Eval-mode Cnn14 forward.  logmel: (B, time_steps, mel_bins) -> (B, 2048)."""
    # bn0 over mel bins (transpose / BatchNorm2d(64) / transpose, folded)
    s0, b0 = _fold_bn(**params["bn0"])
    x = bn0_apply(logmel, s0, b0)
    x = x[..., None]                      # NHWC: (B, T, mel, 1), bf16

    for blk in params["blocks"]:
        s1, b1 = _fold_bn(**blk["bn1"])
        x = conv3x3_bn_relu(x, blk["w1"] * s1[None, None, None, :], b1)
        s2, b2 = _fold_bn(**blk["bn2"])
        x = conv3x3_bn_relu(x, blk["w2"] * s2[None, None, None, :], b2)
        x = avg_pool_2x2(x)
        # F.dropout(p=0.2) is identity in eval mode.

    # mean over mel, then max+mean over time
    return head_pool(x)                   # (B, 2048) f32


# ---------------------------------------------------------------------------
# main
# ---------------------------------------------------------------------------

if __name__ == "__main__":
    key = jax.random.PRNGKey(0)
    k_x, k_params, k_cx, k_cw, k_cb = jax.random.split(key, 5)

    # --- small self-checks of the individual kernels -----------------------
    xc = jax.random.normal(k_cx, (2, 16, 16, 8), jnp.float32)
    wc = jax.random.normal(k_cw, (3, 3, 8, 32), jnp.float32) * 0.1
    bc = jax.random.normal(k_cb, (32,), jnp.float32) * 0.1

    # bf16-round-tripped inputs so the reference measures the same precision.
    xb = xc.astype(jnp.bfloat16).astype(jnp.float32)
    wb = wc.astype(jnp.bfloat16).astype(jnp.float32)

    got = conv3x3_bn_relu(xc, wc, bc).astype(jnp.float32)
    ref = jax.lax.conv_general_dilated(
        xb, wb, window_strides=(1, 1), padding="SAME",
        dimension_numbers=("NHWC", "HWIO", "NHWC"),
        precision=jax.lax.Precision.HIGHEST)
    ref = jnp.maximum(ref + bc[None, None, None, :], 0.0)
    assert jnp.allclose(got, ref, atol=2e-2, rtol=2e-2), "conv kernel mismatch"

    gp = avg_pool_2x2(xc).astype(jnp.float32)
    rp = xb.reshape(2, 8, 2, 8, 2, 8).mean(axis=(2, 4))
    assert jnp.allclose(gp, rp, atol=1e-2, rtol=1e-2), "pool kernel mismatch"

    gh = head_pool(xc.astype(jnp.bfloat16))
    th = xb.mean(axis=2)
    rh = th.max(axis=1) + th.mean(axis=1)
    assert jnp.allclose(gh, rh, atol=2e-3, rtol=2e-3), "head kernel mismatch"

    # --- full Cnn14 eval forward at small shapes ----------------------------
    B, T, MEL = 2, 64, 64                  # mel_bins=64 (bn0 = BatchNorm2d(64))
    logmel = jax.random.normal(k_x, (B, T, MEL), jnp.float32)
    params = init_cnn14_params(k_params, mel_bins=MEL)

    forward = jax.jit(cnn14_forward)
    out = forward(params, logmel)
    out = jax.block_until_ready(out)

    assert out.shape == (B, 2048), out.shape
    assert bool(jnp.all(jnp.isfinite(out)))
    print("KERNEL_OK")
</pallas_src>

<mosaic_0001>
module attributes {stable_mosaic.version = 11 : i64} {
  func.func @_matmul_bias_act_kernel(%arg0: i32, %arg1: i32, %arg2: i32, %arg3: memref<256x72xbf16, #tpu.memory_space<vmem>>, %arg4: memref<72x32xbf16, #tpu.memory_space<vmem>>, %arg5: memref<1x32xf32, #tpu.memory_space<vmem>>, %arg6: memref<256x32xbf16, #tpu.memory_space<vmem>>, %arg7: memref<256x32xf32, #tpu.memory_space<vmem>>) attributes {dimension_semantics = [#tpu.dimension_semantics<parallel>, #tpu.dimension_semantics<parallel>, #tpu.dimension_semantics<arbitrary>], iteration_bounds = array<i64: 2, 1, 1>, scalar_prefetch = 0 : i64, scratch_operands = 1 : i64, tpu.core_type = #tpu.core_type<tc>, window_params = [{transform_indices = @transform_0, window_bounds = array<i64: 256, 72>}, {transform_indices = @transform_1, window_bounds = array<i64: 72, 32>}, {transform_indices = @transform_2, window_bounds = array<i64: 1, 32>}, {transform_indices = @transform_3, window_bounds = array<i64: 256, 32>}]} {
    %c0_i32 = arith.constant 0 : i32
    %0 = arith.cmpi eq, %arg2, %c0_i32 : i32
    %1 = arith.extui %0 : i1 to i32
    %c0_i32_0 = arith.constant 0 : i32
    %2 = arith.cmpi ne, %1, %c0_i32_0 : i32
    scf.if %2 {
      %cst_10 = arith.constant 0.000000e+00 : f32
      %12 = vector.broadcast %cst_10 : f32 to vector<256x32xf32>
      %c0_11 = arith.constant 0 : index
      %c0_12 = arith.constant 0 : index
      %13 = vector.load %arg7[%c0_11, %c0_12] : memref<256x32xf32, #tpu.memory_space<vmem>>, vector<256x32xf32>
      tpu.vector_store %arg7[%c0_11, %c0_12], %12 {strides = array<i32>} : memref<256x32xf32, #tpu.memory_space<vmem>>, vector<256x32xf32>,
    } else {
    }
    %c0 = arith.constant 0 : index
    %c0_1 = arith.constant 0 : index
    %3 = vector.load %arg7[%c0, %c0_1] : memref<256x32xf32, #tpu.memory_space<vmem>>, vector<256x32xf32>
    %c0_2 = arith.constant 0 : index
    %c0_3 = arith.constant 0 : index
    %4 = vector.load %arg3[%c0_2, %c0_3] : memref<256x72xbf16, #tpu.memory_space<vmem>>, vector<256x72xbf16>
    %c0_4 = arith.constant 0 : index
    %c0_5 = arith.constant 0 : index
    %5 = vector.load %arg4[%c0_4, %c0_5] : memref<72x32xbf16, #tpu.memory_space<vmem>>, vector<72x32xbf16>
    %cst = arith.constant dense<0.000000e+00> : vector<256x32xf32>
    %6 = tpu.matmul %4, %5, %cst {dimension_numbers = #tpu.dot_dimension_numbers<[1], [0], [0], [1], [0, 0, 1, 1], [], []>} : vector<256x72xbf16>, vector<72x32xbf16>, vector<256x32xf32> -> vector<256x32xf32>
    %7 = arith.addf %3, %6 : vector<256x32xf32>
    %c0_6 = arith.constant 0 : index
    %c0_7 = arith.constant 0 : index
    %8 = vector.load %arg7[%c0_6, %c0_7] : memref<256x32xf32, #tpu.memory_space<vmem>>, vector<256x32xf32>
    tpu.vector_store %arg7[%c0_6, %c0_7], %7 {strides = array<i32>} : memref<256x32xf32, #tpu.memory_space<vmem>>, vector<256x32xf32>,
    %c0_i32_8 = arith.constant 0 : i32
    %9 = arith.cmpi eq, %arg2, %c0_i32_8 : i32
    %10 = arith.extui %9 : i1 to i32
    %c0_i32_9 = arith.constant 0 : i32
    %11 = arith.cmpi ne, %10, %c0_i32_9 : i32
    scf.if %11 {
      %c0_10 = arith.constant 0 : index
      %c0_11 = arith.constant 0 : index
      %12 = vector.load %arg7[%c0_10, %c0_11] : memref<256x32xf32, #tpu.memory_space<vmem>>, vector<256x32xf32>
      %c0_12 = arith.constant 0 : index
      %c0_13 = arith.constant 0 : index
      %13 = vector.load %arg5[%c0_12, %c0_13] : memref<1x32xf32, #tpu.memory_space<vmem>>, vector<1x32xf32>
      %14 = vector.broadcast %13 : vector<1x32xf32> to vector<256x32xf32>
      %15 = arith.addf %12, %14 : vector<256x32xf32>
      %cst_14 = arith.constant 0.000000e+00 : f32
      %16 = vector.broadcast %cst_14 : f32 to vector<256x32xf32>
      %17 = arith.maximumf %15, %16 : vector<256x32xf32>
      %18 = arith.truncf %17 : vector<256x32xf32> to vector<256x32xbf16>
      %c0_15 = arith.constant 0 : index
      %c0_16 = arith.constant 0 : index
      %19 = vector.load %arg6[%c0_15, %c0_16] : memref<256x32xbf16, #tpu.memory_space<vmem>>, vector<256x32xbf16>
      tpu.vector_store %arg6[%c0_15, %c0_16], %18 {strides = array<i32>} : memref<256x32xbf16, #tpu.memory_space<vmem>>, vector<256x32xbf16>,
    } else {
    }
    return
  }
  func.func @transform_0(%arg0: i32, %arg1: i32, %arg2: i32) -> (i32, i32) {
    %c0_i32 = arith.constant 0 : i32
    return %arg0, %arg2 : i32, i32
  }
  func.func @transform_1(%arg0: i32, %arg1: i32, %arg2: i32) -> (i32, i32) {
    %c0_i32 = arith.constant 0 : i32
    return %arg2, %arg1 : i32, i32
  }
  func.func @transform_2(%arg0: i32, %arg1: i32, %arg2: i32) -> (i32, i32) {
    %c0_i32 = arith.constant 0 : i32
    %c0_i32_0 = arith.constant 0 : i32
    return %c0_i32, %arg1 : i32, i32
  }
  func.func @transform_3(%arg0: i32, %arg1: i32, %arg2: i32) -> (i32, i32) {
    %c0_i32 = arith.constant 0 : i32
    return %arg0, %arg1 : i32, i32
  }
}

</mosaic_0001>

<llo_original>
// kernel: tpu_custom_call.1
$region0: #{tpu_custom_call.1}
  #allocation0 [shape = 'u32[]', space=smem, size = 0x4, offset = 0x4, fixed_abs, tag = 'smem constant byte address 0x4 - core index']
  #allocation1 [shape = 'u32[144,128]{1,0:T(1,128)}', space=vmem, size = 0x12000, scoped, tag = 'internal scratch']
  #allocation2 [shape = 'f32[256,32]{1,0:T(8,128)}', space=vmem, size = 0x20000, scoped, tag = 'scratch operand']
  %s0 = inlined_call_operand.vmem [shape: bf16[512,72], index: 0, kind: input, shape index: {}]
  %s1 = inlined_call_operand.vmem [shape: bf16[72,32], index: 1, kind: input, shape index: {}]
  %s2 = inlined_call_operand.vmem [shape: f32[1,32], index: 2, kind: input, shape index: {}]
  %s3 = inlined_call_operand.vmem [shape: bf16[512,32], index: 3, kind: output, shape index: {}]
  %s4 = sld [smem:[#allocation0]]
  $region53: #{tpu_custom_call.1} parent=0
    _
  %s6 = ssub.s32 1, %s4
  %s7 = scalar_select 0, %s6, %s4
  loop: start=0, step=1, limit=4
  $region2: #{tpu_custom_call.1} parent=0 // loop_pre_header
    _
  $region3: #{tpu_custom_call.1} parent=0 // loop_header
    %s9 = sphi 0, %s13
    %p10 = scmp.ge.s32.totalorder %s9, 4
    %s16 = sphi 0, %s35
    %s17 = sphi 0, %s31
    %s18 = sphi 0, %s27
    %s19 = sphi 0, %s16
    %s20 = sphi 0, %s17
    %s21 = sphi 0, %s18
    %s22 = sphi 0, %s19
    %s23 = sphi 0, %s20
    %s24 = sphi 0, %s21
    %s40 = sphi 0, %s42
    %s43 = sphi 0, %s40
    %s44 = sphi 0, %s43
    %s60 = sphi 0, %s44
    %s68 = sphi 0, %s70
    %s71 = sphi 0, %s68
    %s72 = sphi 0, %s71
    %s88 = sphi 0, %s72
    %s94 = sphi 0, %s96
    %s97 = sphi 0, %s94
    %s98 = sphi 0, %s97
    %s114 = sphi 0, %s98
    %s122 = sphi 0, %s124
    %s125 = sphi 0, %s122
    %s126 = sphi 0, %s125
    %s142 = sphi 0, %s126
  $region4: #{tpu_custom_call.1} parent=0 // loop_header_branch
    %12 = sbr.rel (%p10) target = $region8
  $region5: #{tpu_custom_call.1} parent=0 // loop_body
    %s14 = ssub.s32 %s9, 1
    %s15 = ssub.s32 %s9, 2
    %s25 = sadd.s32 1, %s18
    %p26 = scmp.ge.s32.totalorder %s25, 1
    %s27 = scalar_select %p26, 0, %s25
    %s28 = sadd.s32 1, %s17
    %s29 = scalar_select %p26, %s28, %s17
    %p30 = scmp.ge.s32.totalorder %s29, 1
    %s31 = scalar_select %p30, 0, %s29
    %s32 = sadd.s32 1, %s16
    %s33 = scalar_select %p30, %s32, %s16
    %p34 = scmp.ge.s32.totalorder %s33, 2
    %s35 = scalar_select %p34, 0, %s33
    %s36 = ssub.s32 %s16, %s35
    %s37 = ssub.s32 %s18, %s27
    %s38 = sor.u32 %s36, %s37
    %p39 = scmp.eq.s32.totalorder %s38, 0
    %s41 = sadd.s32 %s40, 1
    %s42 = scalar_select %p39, %s40, %s41
    %p45 = pneg %p39
    %p46 = scmp.eq.s32.totalorder %s9, 1
    %p47 = por %p45, %p46
    %p48 = scmp.ne.s32.totalorder %s40, %s43
    %p49 = scmp.eq.s32.totalorder %s9, 0
    %p50 = por %p48, %p49
    %p51 = scmp.ne.s32.totalorder %s40, %s43
    %p52 = scmp.eq.s32.totalorder %s14, 1
    %p53 = por %p51, %p52
    %p54 = scmp.ne.s32.totalorder %s43, %s44
    %p55 = scmp.eq.s32.totalorder %s14, 0
    %p56 = por %p54, %p55
    %p57 = scmp.ne.s32.totalorder %s43, %s44
    %p58 = scmp.eq.s32.totalorder %s15, 1
    %p59 = por %p57, %p58
    %p61 = scmp.ne.s32.totalorder %s44, %s60
    %p62 = scmp.eq.s32.totalorder %s15, 0
    %p63 = por %p61, %p62
    %s64 = ssub.s32 %s18, %s27
    %s65 = ssub.s32 %s17, %s31
    %s66 = sor.u32 %s64, %s65
    %p67 = scmp.eq.s32.totalorder %s66, 0
    %s69 = sadd.s32 %s68, 1
    %s70 = scalar_select %p67, %s68, %s69
    %p73 = pneg %p67
    %p74 = scmp.eq.s32.totalorder %s9, 1
    %p75 = por %p73, %p74
    %p76 = scmp.ne.s32.totalorder %s68, %s71
    %p77 = scmp.eq.s32.totalorder %s9, 0
    %p78 = por %p76, %p77
    %p79 = scmp.ne.s32.totalorder %s68, %s71
    %p80 = scmp.eq.s32.totalorder %s14, 1
    %p81 = por %p79, %p80
    %p82 = scmp.ne.s32.totalorder %s71, %s72
    %p83 = scmp.eq.s32.totalorder %s14, 0
    %p84 = por %p82, %p83
    %p85 = scmp.ne.s32.totalorder %s71, %s72
    %p86 = scmp.eq.s32.totalorder %s15, 1
    %p87 = por %p85, %p86
    %p89 = scmp.ne.s32.totalorder %s72, %s88
    %p90 = scmp.eq.s32.totalorder %s15, 0
    %p91 = por %p89, %p90
    %s92 = ssub.s32 %s17, %s31
    %p93 = scmp.eq.s32.totalorder %s92, 0
    %s95 = sadd.s32 %s94, 1
    %s96 = scalar_select %p93, %s94, %s95
    %p99 = pneg %p93
    %p100 = scmp.eq.s32.totalorder %s9, 1
    %p101 = por %p99, %p100
    %p102 = scmp.ne.s32.totalorder %s94, %s97
    %p103 = scmp.eq.s32.totalorder %s9, 0
    %p104 = por %p102, %p103
    %p105 = scmp.ne.s32.totalorder %s94, %s97
    %p106 = scmp.eq.s32.totalorder %s14, 1
    %p107 = por %p105, %p106
    %p108 = scmp.ne.s32.totalorder %s97, %s98
    %p109 = scmp.eq.s32.totalorder %s14, 0
    %p110 = por %p108, %p109
    %p111 = scmp.ne.s32.totalorder %s97, %s98
    %p112 = scmp.eq.s32.totalorder %s15, 1
    %p113 = por %p111, %p112
    %p115 = scmp.ne.s32.totalorder %s98, %s114
    %p116 = scmp.eq.s32.totalorder %s15, 0
    %p117 = por %p115, %p116
    %s118 = ssub.s32 %s16, %s35
    %s119 = ssub.s32 %s17, %s31
    %s120 = sor.u32 %s118, %s119
    %p121 = scmp.eq.s32.totalorder %s120, 0
    %s123 = sadd.s32 %s122, 1
    %s124 = scalar_select %p121, %s122, %s123
    %p127 = pneg %p121
    %p128 = scmp.eq.s32.totalorder %s9, 1
    %p129 = por %p127, %p128
    %p130 = scmp.ne.s32.totalorder %s122, %s125
    %p131 = scmp.eq.s32.totalorder %s9, 0
    %p132 = por %p130, %p131
    %p133 = scmp.ne.s32.totalorder %s122, %s125
    %p134 = scmp.eq.s32.totalorder %s14, 1
    %p135 = por %p133, %p134
    %p136 = scmp.ne.s32.totalorder %s125, %s126
    %p137 = scmp.eq.s32.totalorder %s14, 0
    %p138 = por %p136, %p137
    %p139 = scmp.ne.s32.totalorder %s125, %s126
    %p140 = scmp.eq.s32.totalorder %s15, 1
    %p141 = por %p139, %p140
    %p143 = scmp.ne.s32.totalorder %s126, %s142
    %p144 = scmp.eq.s32.totalorder %s15, 0
    %p145 = por %p143, %p144
    %p146 = scmp.le.s32.totalorder 1, %s9
    %p147 = scmp.lt.s32.totalorder %s9, 3
    %p148 = pnand %p146, %p147
    %p149 = pneg %p148
    // Predicated region
    $region9: #{tpu_custom_call.1} parent=5 // pred_check
      _
    $region10: #{tpu_custom_call.1} parent=5 // pred_check_branch
      %151 = sbr.rel (%p148) target = $region12
    $region11: #{tpu_custom_call.1} parent=5 // pred_region
      %s152 = ssub.s32 %s9, 1
      // Predicated region
      $region13: #{tpu_custom_call.1} parent=11 // pred_check
        %p153 = pneg %p84
      $region14: #{tpu_custom_call.1} parent=11 // pred_check_branch
        %155 = sbr.rel (%p153) target = $region16
      $region15: #{tpu_custom_call.1} parent=11 // pred_region
        %s156 = smul.u32 9, %s21
        %p157 = scmp.lt.s32.totalorder %s156, 8
        %s158 = scalar_select %p157, %s156, 8
        %p159 = scmp.lt.s32.totalorder %s20, 0
        %s160 = scalar_select %p159, %s20, 0
        %s161 = sadd.s32 %s160, %s158
        %s162 = smul.addr %s161, 4
        %s163 = scalar_lea.vmem %s1, %s162
        %s164 = smul.u32 9, %s21
      $region16: #{tpu_custom_call.1} parent=11 // pred_fallthru
        _
      // Predicated region
      $region17: #{tpu_custom_call.1} parent=11 // pred_check
        %p165 = pneg %p110
      $region18: #{tpu_custom_call.1} parent=11 // pred_check_branch
        %167 = sbr.rel (%p165) target = $region20
      $region19: #{tpu_custom_call.1} parent=11 // pred_region
        %p168 = scmp.lt.s32.totalorder %s20, 0
        %s169 = scalar_select %p168, %s20, 0
        %s170 = scalar_lea.vmem %s2, %s169
      $region20: #{tpu_custom_call.1} parent=11 // pred_fallthru
        _
    $region12: #{tpu_custom_call.1} parent=5 // pred_fallthru
      _
    %p171 = scmp.lt.s32.totalorder %s9, 2
    // Predicated region
    $region21: #{tpu_custom_call.1} parent=5 // pred_check
      %p172 = pneg %p171
    $region22: #{tpu_custom_call.1} parent=5 // pred_check_branch
      %174 = sbr.rel (%p172) target = $region24
    $region23: #{tpu_custom_call.1} parent=5 // pred_region
      // Predicated region
      $region25: #{tpu_custom_call.1} parent=23 // pred_check
        %p175 = pneg %p50
      $region26: #{tpu_custom_call.1} parent=23 // pred_check_branch
        %177 = sbr.rel (%p175) target = $region28
      $region27: #{tpu_custom_call.1} parent=23 // pred_region
        %s178 = smul.u32 32, %s16
        %p179 = scmp.lt.s32.totalorder %s178, 63
        %s180 = scalar_select %p179, %s178, 63
        %p181 = scmp.lt.s32.totalorder %s18, 0
        %s182 = scalar_select %p181, %s18, 0
        %s183 = sadd.s32 %s182, %s180
        %s184 = smul.addr %s183, 4
        %s185 = scalar_lea.vmem %s0, %s184
        %s186 = smul.u32 32, %s16
      $region28: #{tpu_custom_call.1} parent=23 // pred_fallthru
        _
    $region24: #{tpu_custom_call.1} parent=5 // pred_fallthru
      _
    %p187 = scmp.le.s32.totalorder 1, %s9
    %p188 = scmp.lt.s32.totalorder %s9, 3
    %p189 = pnand %p187, %p188
    %p190 = pneg %p189
    // Predicated region
    $region29: #{tpu_custom_call.1} parent=5 // pred_check
      _
    $region30: #{tpu_custom_call.1} parent=5 // pred_check_branch
      %192 = sbr.rel (%p189) target = $region32
    $region31: #{tpu_custom_call.1} parent=5 // pred_region
      %s193 = ssub.s32 %s9, 1
      %s194 = smul.u32 32, %s19
      %p195 = scmp.lt.s32.totalorder %s194, 63
      %s196 = scalar_select %p195, %s194, 63
      %p197 = scmp.lt.s32.totalorder %s21, 0
      %s198 = scalar_select %p197, %s21, 0
      %s199 = sadd.s32 %s198, %s196
      %s200 = smul.addr %s199, 4
      %s201 = scalar_lea.vmem %s0, %s200
      %p202 = pneg %p56
      %p203 = pneg %p53
      %s204 = smul.u32 9, %s21
      %p205 = scmp.lt.s32.totalorder %s204, 8
      %s206 = scalar_select %p205, %s204, 8
      %p207 = scmp.lt.s32.totalorder %s20, 0
      %s208 = scalar_select %p207, %s20, 0
      %s209 = sadd.s32 %s208, %s206
      %s210 = smul.addr %s209, 4
      %s211 = scalar_lea.vmem %s1, %s210
      %p212 = pneg %p84
      %p213 = pneg %p81
      %p214 = scmp.lt.s32.totalorder %s20, 0
      %s215 = scalar_select %p214, %s20, 0
      %s216 = scalar_lea.vmem %s2, %s215
      %p217 = pneg %p110
      %p218 = pneg %p107
      %p219 = pneg %p138
      %p220 = pneg %p135
      %s221 = smul.u32 32, %s19
      %p222 = scmp.lt.s32.totalorder %s221, 63
      %s223 = scalar_select %p222, %s221, 63
      %p224 = scmp.lt.s32.totalorder %s20, 0
      %s225 = scalar_select %p224, %s20, 0
      %s226 = sadd.s32 %s225, %s223
      %s227 = smul.addr %s226, 4
      %s228 = scalar_lea.vmem %s3, %s227
      %s229 = smul.u32 32, %s19
      %p230 = scmp.lt.s32.totalorder %s229, 63
      %s231 = scalar_select %p230, %s229, 63
      %p232 = scmp.lt.s32.totalorder %s21, 0
      %s233 = scalar_select %p232, %s21, 0
      %s234 = sadd.s32 %s233, %s231
      %s235 = smul.addr %s234, 4
      %s236 = scalar_lea.vmem %s0, %s235
      %s237 = smul.u32 32, %s19
      %s238 = smul.u32 9, %s21
      %p239 = scmp.lt.s32.totalorder %s238, 8
      %s240 = scalar_select %p239, %s238, 8
      %p241 = scmp.lt.s32.totalorder %s20, 0
      %s242 = scalar_select %p241, %s20, 0
      %s243 = sadd.s32 %s242, %s240
      %s244 = smul.addr %s243, 4
      %s245 = scalar_lea.vmem %s1, %s244
      %s246 = smul.u32 9, %s21
      %p247 = scmp.lt.s32.totalorder %s20, 0
      %s248 = scalar_select %p247, %s20, 0
      %s249 = scalar_lea.vmem %s2, %s248
      %s250 = smul.u32 32, %s19
      %p251 = scmp.lt.s32.totalorder %s250, 63
      %s252 = scalar_select %p251, %s250, 63
      %p253 = scmp.lt.s32.totalorder %s20, 0
      %s254 = scalar_select %p253, %s20, 0
      %s255 = sadd.s32 %s254, %s252
      %s256 = smul.addr %s255, 4
      %s257 = scalar_lea.vmem %s3, %s256
      %s258 = smul.u32 32, %s19
      %p260 = scmp.eq.s32.totalorder %s21, 0
      // Predicated region
      $region33: #{tpu_custom_call.1} parent=31 // pred_check
        %p261 = pneg %p260
      $region34: #{tpu_custom_call.1} parent=31 // pred_check_branch
        %263 = sbr.rel (%p261) target = $region36
      $region35: #{tpu_custom_call.1} parent=31 // pred_region
        %vm264 = vcmask 261120
        %265 = vst.msk [vmem:[#allocation2] sm:$0xff] %vm264, 0.0
        %266 = vst.msk [vmem:[#allocation2 + $0x8] sm:$0xff] %vm264, 0.0
        %267 = vst.msk [vmem:[#allocation2 + $0x10] sm:$0xff] %vm264, 0.0
        %268 = vst.msk [vmem:[#allocation2 + $0x18] sm:$0xff] %vm264, 0.0
        %269 = vst.msk [vmem:[#allocation2 + $0x20] sm:$0xff] %vm264, 0.0
        %270 = vst.msk [vmem:[#allocation2 + $0x28] sm:$0xff] %vm264, 0.0
        %271 = vst.msk [vmem:[#allocation2 + $0x30] sm:$0xff] %vm264, 0.0
        %272 = vst.msk [vmem:[#allocation2 + $0x38] sm:$0xff] %vm264, 0.0
        %273 = vst.msk [vmem:[#allocation2 + $0x40] sm:$0xff] %vm264, 0.0
        %274 = vst.msk [vmem:[#allocation2 + $0x48] sm:$0xff] %vm264, 0.0
        %275 = vst.msk [vmem:[#allocation2 + $0x50] sm:$0xff] %vm264, 0.0
        %276 = vst.msk [vmem:[#allocation2 + $0x58] sm:$0xff] %vm264, 0.0
        %277 = vst.msk [vmem:[#allocation2 + $0x60] sm:$0xff] %vm264, 0.0
        %278 = vst.msk [vmem:[#allocation2 + $0x68] sm:$0xff] %vm264, 0.0
        %279 = vst.msk [vmem:[#allocation2 + $0x70] sm:$0xff] %vm264, 0.0
        %280 = vst.msk [vmem:[#allocation2 + $0x78] sm:$0xff] %vm264, 0.0
        %281 = vst.msk [vmem:[#allocation2 + $0x80] sm:$0xff] %vm264, 0.0
        %282 = vst.msk [vmem:[#allocation2 + $0x88] sm:$0xff] %vm264, 0.0
        %283 = vst.msk [vmem:[#allocation2 + $0x90] sm:$0xff] %vm264, 0.0
        %284 = vst.msk [vmem:[#allocation2 + $0x98] sm:$0xff] %vm264, 0.0
        %285 = vst.msk [vmem:[#allocation2 + $0xa0] sm:$0xff] %vm264, 0.0
        %286 = vst.msk [vmem:[#allocation2 + $0xa8] sm:$0xff] %vm264, 0.0
        %287 = vst.msk [vmem:[#allocation2 + $0xb0] sm:$0xff] %vm264, 0.0
        %288 = vst.msk [vmem:[#allocation2 + $0xb8] sm:$0xff] %vm264, 0.0
        %289 = vst.msk [vmem:[#allocation2 + $0xc0] sm:$0xff] %vm264, 0.0
        %290 = vst.msk [vmem:[#allocation2 + $0xc8] sm:$0xff] %vm264, 0.0
        %291 = vst.msk [vmem:[#allocation2 + $0xd0] sm:$0xff] %vm264, 0.0
        %292 = vst.msk [vmem:[#allocation2 + $0xd8] sm:$0xff] %vm264, 0.0
        %293 = vst.msk [vmem:[#allocation2 + $0xe0] sm:$0xff] %vm264, 0.0
        %294 = vst.msk [vmem:[#allocation2 + $0xe8] sm:$0xff] %vm264, 0.0
        %295 = vst.msk [vmem:[#allocation2 + $0xf0] sm:$0xff] %vm264, 0.0
        %296 = vst.msk [vmem:[#allocation2 + $0xf8] sm:$0xff] %vm264, 0.0
      $region36: #{tpu_custom_call.1} parent=31 // pred_fallthru
        _
      %v297 = vld [vmem:[#allocation2] sm:$0xff]
      %v298 = vld [vmem:[#allocation2 + $0x8] sm:$0xff]
      %v299 = vld [vmem:[#allocation2 + $0x10] sm:$0xff]
      %v300 = vld [vmem:[#allocation2 + $0x18] sm:$0xff]
      %v301 = vld [vmem:[#allocation2 + $0x20] sm:$0xff]
      %v302 = vld [vmem:[#allocation2 + $0x28] sm:$0xff]
      %v303 = vld [vmem:[#allocation2 + $0x30] sm:$0xff]
      %v304 = vld [vmem:[#allocation2 + $0x38] sm:$0xff]
      %v305 = vld [vmem:[#allocation2 + $0x40] sm:$0xff]
      %v306 = vld [vmem:[#allocation2 + $0x48] sm:$0xff]
      %v307 = vld [vmem:[#allocation2 + $0x50] sm:$0xff]
      %v308 = vld [vmem:[#allocation2 + $0x58] sm:$0xff]
      %v309 = vld [vmem:[#allocation2 + $0x60] sm:$0xff]
      %v310 = vld [vmem:[#allocation2 + $0x68] sm:$0xff]
      %v311 = vld [vmem:[#allocation2 + $0x70] sm:$0xff]
      %v312 = vld [vmem:[#allocation2 + $0x78] sm:$0xff]
      %v313 = vld [vmem:[#allocation2 + $0x80] sm:$0xff]
      %v314 = vld [vmem:[#allocation2 + $0x88] sm:$0xff]
      %v315 = vld [vmem:[#allocation2 + $0x90] sm:$0xff]
      %v316 = vld [vmem:[#allocation2 + $0x98] sm:$0xff]
      %v317 = vld [vmem:[#allocation2 + $0xa0] sm:$0xff]
      %v318 = vld [vmem:[#allocation2 + $0xa8] sm:$0xff]
      %v319 = vld [vmem:[#allocation2 + $0xb0] sm:$0xff]
      %v320 = vld [vmem:[#allocation2 + $0xb8] sm:$0xff]
      %v321 = vld [vmem:[#allocation2 + $0xc0] sm:$0xff]
      %v322 = vld [vmem:[#allocation2 + $0xc8] sm:$0xff]
      %v323 = vld [vmem:[#allocation2 + $0xd0] sm:$0xff]
      %v324 = vld [vmem:[#allocation2 + $0xd8] sm:$0xff]
      %v325 = vld [vmem:[#allocation2 + $0xe0] sm:$0xff]
      %v326 = vld [vmem:[#allocation2 + $0xe8] sm:$0xff]
      %v327 = vld [vmem:[#allocation2 + $0xf0] sm:$0xff]
      %v328 = vld [vmem:[#allocation2 + $0xf8] sm:$0xff]
      %v329 = vld [vmem:[%s236] sm:$0xf]
      %v330 = vld [vmem:[%s236 + $0x4] sm:$0xf]
      %v331 = vld [vmem:[%s236 + $0x8] sm:$0xf]
      %v332 = vld [vmem:[%s236 + $0xc] sm:$0xf]
      %v333 = vld [vmem:[%s236 + $0x10] sm:$0xf]
      %v334 = vld [vmem:[%s236 + $0x14] sm:$0xf]
      %v335 = vld [vmem:[%s236 + $0x18] sm:$0xf]
      %v336 = vld [vmem:[%s236 + $0x1c] sm:$0xf]
      %v337 = vld [vmem:[%s236 + $0x20] sm:$0xf]
      %v338 = vld [vmem:[%s236 + $0x24] sm:$0xf]
      %v339 = vld [vmem:[%s236 + $0x28] sm:$0xf]
      %v340 = vld [vmem:[%s236 + $0x2c] sm:$0xf]
      %v341 = vld [vmem:[%s236 + $0x30] sm:$0xf]
      %v342 = vld [vmem:[%s236 + $0x34] sm:$0xf]
      %v343 = vld [vmem:[%s236 + $0x38] sm:$0xf]
      %v344 = vld [vmem:[%s236 + $0x3c] sm:$0xf]
      %v345 = vld [vmem:[%s236 + $0x40] sm:$0xf]
      %v346 = vld [vmem:[%s236 + $0x44] sm:$0xf]
      %v347 = vld [vmem:[%s236 + $0x48] sm:$0xf]
      %v348 = vld [vmem:[%s236 + $0x4c] sm:$0xf]
      %v349 = vld [vmem:[%s236 + $0x50] sm:$0xf]
      %v350 = vld [vmem:[%s236 + $0x54] sm:$0xf]
      %v351 = vld [vmem:[%s236 + $0x58] sm:$0xf]
      %v352 = vld [vmem:[%s236 + $0x5c] sm:$0xf]
      %v353 = vld [vmem:[%s236 + $0x60] sm:$0xf]
      %v354 = vld [vmem:[%s236 + $0x64] sm:$0xf]
      %v355 = vld [vmem:[%s236 + $0x68] sm:$0xf]
      %v356 = vld [vmem:[%s236 + $0x6c] sm:$0xf]
      %v357 = vld [vmem:[%s236 + $0x70] sm:$0xf]
      %v358 = vld [vmem:[%s236 + $0x74] sm:$0xf]
      %v359 = vld [vmem:[%s236 + $0x78] sm:$0xf]
      %v360 = vld [vmem:[%s236 + $0x7c] sm:$0xf]
      %v361 = vld [vmem:[%s245] sm:$0xf]
      %v362 = vld [vmem:[%s245 + $0x4] sm:$0xf]
      %v363 = vld [vmem:[%s245 + $0x8] sm:$0xf]
      %v364 = vld [vmem:[%s245 + $0xc] sm:$0xf]
      %v365 = vld [vmem:[%s245 + $0x10] sm:$0xf]
      %v366 = vld [vmem:[%s245 + $0x14] sm:$0xf]
      %v367 = vld [vmem:[%s245 + $0x18] sm:$0xf]
      %v368 = vld [vmem:[%s245 + $0x1c] sm:$0xf]
      %v369 = vld [vmem:[%s245 + $0x20] sm:$0xf]
      %v402 = vunpack.c.l.b16 %v329
      %v403 = vunpack.c.l.b16 %v330
      %v404 = vunpack.c.l.b16 %v331
      %v405 = vunpack.c.l.b16 %v332
      %v406 = vunpack.c.l.b16 %v333
      %v407 = vunpack.c.l.b16 %v334
      %v408 = vunpack.c.l.b16 %v335
      %v409 = vunpack.c.l.b16 %v336
      %v410 = vunpack.c.l.b16 %v337
      %v411 = vunpack.c.l.b16 %v338
      %v412 = vunpack.c.l.b16 %v339
      %v413 = vunpack.c.l.b16 %v340
      %v414 = vunpack.c.l.b16 %v341
      %v415 = vunpack.c.l.b16 %v342
      %v416 = vunpack.c.l.b16 %v343
      %v417 = vunpack.c.l.b16 %v344
      %v418 = vunpack.c.l.b16 %v345
      %v419 = vunpack.c.l.b16 %v346
      %v420 = vunpack.c.l.b16 %v347
      %v421 = vunpack.c.l.b16 %v348
      %v422 = vunpack.c.l.b16 %v349
      %v423 = vunpack.c.l.b16 %v350
      %v424 = vunpack.c.l.b16 %v351
      %v425 = vunpack.c.l.b16 %v352
      %v426 = vunpack.c.l.b16 %v353
      %v427 = vunpack.c.l.b16 %v354
      %v428 = vunpack.c.l.b16 %v355
      %v429 = vunpack.c.l.b16 %v356
      %v430 = vunpack.c.l.b16 %v357
      %v431 = vunpack.c.l.b16 %v358
      %v432 = vunpack.c.l.b16 %v359
      %v433 = vunpack.c.l.b16 %v360
      %v434 = vpack.c.b16 %v403, %v402
      %v435 = vpack.c.b16 %v405, %v404
      %v436 = vpack.c.b16 %v407, %v406
      %v437 = vpack.c.b16 %v409, %v408
      %v438 = vpack.c.b16 %v411, %v410
      %v439 = vpack.c.b16 %v413, %v412
      %v440 = vpack.c.b16 %v415, %v414
      %v441 = vpack.c.b16 %v417, %v416
      %v442 = vpack.c.b16 %v419, %v418
      %v443 = vpack.c.b16 %v421, %v420
      %v444 = vpack.c.b16 %v423, %v422
      %v445 = vpack.c.b16 %v425, %v424
      %v446 = vpack.c.b16 %v427, %v426
      %v447 = vpack.c.b16 %v429, %v428
      %v448 = vpack.c.b16 %v431, %v430
      %v449 = vpack.c.b16 %v433, %v432
      %v459 = vunpack.c.l.b16 %v361
      %v460 = vunpack.c.l.b16 %v362
      %v461 = vunpack.c.l.b16 %v363
      %v462 = vunpack.c.l.b16 %v364
      %v463 = vunpack.c.l.b16 %v365
      %v464 = vunpack.c.l.b16 %v366
      %v465 = vunpack.c.l.b16 %v367
      %v466 = vunpack.c.l.b16 %v368
      %v467 = vunpack.c.l.b16 %v369
      %v468 = vpack.c.b16 %v460, %v459
      %v469 = vpack.c.b16 %v462, %v461
      %v470 = vpack.c.b16 %v464, %v463
      %v471 = vpack.c.b16 %v466, %v465
      %v472 = vpack.c.b16 %v467, %v467
      %vm477 = vcmask 588800
      %v479 = vsel %vm477, %v434, 0
      %v482 = vsel %vm477, %v435, 0
      %v485 = vsel %vm477, %v436, 0
      %v488 = vsel %vm477, %v437, 0
      %v491 = vsel %vm477, %v438, 0
      %v494 = vsel %vm477, %v439, 0
      %v497 = vsel %vm477, %v440, 0
      %v500 = vsel %vm477, %v441, 0
      %v503 = vsel %vm477, %v442, 0
      %v506 = vsel %vm477, %v443, 0
      %v509 = vsel %vm477, %v444, 0
      %v512 = vsel %vm477, %v445, 0
      %v515 = vsel %vm477, %v446, 0
      %v518 = vsel %vm477, %v447, 0
      %v521 = vsel %vm477, %v448, 0
      %v524 = vsel %vm477, %v449, 0
      %vm526 = vcmask 1043456
      %v528 = vsel %vm526, %v472, 0
      %530 = vmatprep.subr.bf16.mxu0 0
      %531 = vmatpush1.bf16.msra.mxu0 %v468
      %532 = vmatprep.subr.bf16.mxu0 0
      %533 = vmatpush1.bf16.msra.mxu0 %v469
      %534 = vmatprep.subr.bf16.mxu0 0
      %535 = vmatpush1.bf16.msra.mxu0 %v470
      %536 = vmatprep.subr.bf16.mxu0 0
      %537 = vmatpush1.bf16.msra.mxu0 %v471
      %538 = vmatprep.subr.bf16.mxu0 0
      %539 = vmatpush1.bf16.msra.mxu0 %v528
      %540 = vmatprep.subr.bf16.mxu0 0
      %541 = vmatpush1.bf16.msra.mxu0 0
      %542 = vmatprep.subr.bf16.mxu0 0
      %543 = vmatpush1.bf16.msra.mxu0 0
      %544 = vmatprep.subr.bf16.mxu0 0
      %545 = vmatpush1.bf16.msra.mxu0 0
      %546 = vmatprep.subr.bf16.mxu0 0
      %547 = vmatpush1.bf16.msra.mxu0 0
      %548 = vmatprep.subr.bf16.mxu0 0
      %549 = vmatpush1.bf16.msra.mxu0 0
      %550 = vmatprep.subr.bf16.mxu0 0
      %551 = vmatpush1.bf16.msra.mxu0 0
      %552 = vmatprep.subr.bf16.mxu0 0
      %553 = vmatpush1.bf16.msra.mxu0 0
      %554 = vmatprep.subr.bf16.mxu0 0
      %555 = vmatpush1.bf16.msra.mxu0 0
      %556 = vmatprep.subr.bf16.mxu0 0
      %557 = vmatpush1.bf16.msra.mxu0 0
      %558 = vmatprep.subr.bf16.mxu0 0
      %559 = vmatpush1.bf16.msra.mxu0 0
      %560 = vmatprep.subr.bf16.mxu0 0
      %561 = vmatpush1.bf16.msra.mxu0 0
      %562 = vmatprep.mubr.bf16.mxu0 0
      %563 = vmatmul.mubr.bf16.gmra.mrb[0].mxu0 %v479
      %v564 = vpop.f32.mrb[0].mxu0
      %v565 = vadd.f32 0.0, %v564
      %v566 = vpop.f32.mrb[0].mxu0
      %v567 = vpop.f32.mrb[0].mxu0
      %v568 = vadd.f32 0.0, %v567
      %v569 = vpop.f32.mrb[0].mxu0
      %570 = vmatprep.mubr.bf16.mxu0 0
      %571 = vmatmul.mubr.bf16.gmra.mrb[0].mxu0 %v482
      %v572 = vpop.f32.mrb[0].mxu0
      %v573 = vadd.f32 0.0, %v572
      %v574 = vpop.f32.mrb[0].mxu0
      %v575 = vpop.f32.mrb[0].mxu0
      %v576 = vadd.f32 0.0, %v575
      %v577 = vpop.f32.mrb[0].mxu0
      %578 = vmatprep.mubr.bf16.mxu0 0
      %579 = vmatmul.mubr.bf16.gmra.mrb[0].mxu0 %v485
      %v580 = vpop.f32.mrb[0].mxu0
      %v581 = vadd.f32 0.0, %v580
      %v582 = vpop.f32.mrb[0].mxu0
      %v583 = vpop.f32.mrb[0].mxu0
      %v584 = vadd.f32 0.0, %v583
      %v585 = vpop.f32.mrb[0].mxu0
      %586 = vmatprep.mubr.bf16.mxu0 0
      %587 = vmatmul.mubr.bf16.gmra.mrb[0].mxu0 %v488
      %v588 = vpop.f32.mrb[0].mxu0
      %v589 = vadd.f32 0.0, %v588
      %v590 = vpop.f32.mrb[0].mxu0
      %v591 = vpop.f32.mrb[0].mxu0
      %v592 = vadd.f32 0.0, %v591
      %v593 = vpop.f32.mrb[0].mxu0
      %594 = vmatprep.mubr.bf16.mxu0 0
      %595 = vmatmul.mubr.bf16.gmra.mrb[0].mxu0 %v491
      %v596 = vpop.f32.mrb[0].mxu0
      %v597 = vadd.f32 0.0, %v596
      %v598 = vpop.f32.mrb[0].mxu0
      %v599 = vpop.f32.mrb[0].mxu0
      %v600 = vadd.f32 0.0, %v599
      %v601 = vpop.f32.mrb[0].mxu0
      %602 = vmatprep.mubr.bf16.mxu0 0
      %603 = vmatmul.mubr.bf16.gmra.mrb[0].mxu0 %v494
      %v604 = vpop.f32.mrb[0].mxu0
      %v605 = vadd.f32 0.0, %v604
      %v606 = vpop.f32.mrb[0].mxu0
      %v607 = vpop.f32.mrb[0].mxu0
      %v608 = vadd.f32 0.0, %v607
      %v609 = vpop.f32.mrb[0].mxu0
      %610 = vmatprep.mubr.bf16.mxu0 0
      %611 = vmatmul.mubr.bf16.gmra.mrb[0].mxu0 %v497
      %v612 = vpop.f32.mrb[0].mxu0
      %v613 = vadd.f32 0.0, %v612
      %v614 = vpop.f32.mrb[0].mxu0
      %v615 = vpop.f32.mrb[0].mxu0
      %v616 = vadd.f32 0.0, %v615
      %v617 = vpop.f32.mrb[0].mxu0
      %618 = vmatprep.mubr.bf16.mxu0 0
      %619 = vmatmul.mubr.bf16.gmra.mrb[0].mxu0 %v500
      %v620 = vpop.f32.mrb[0].mxu0
      %v621 = vadd.f32 0.0, %v620
      %v622 = vpop.f32.mrb[0].mxu0
      %v623 = vpop.f32.mrb[0].mxu0
      %v624 = vadd.f32 0.0, %v623
      %v625 = vpop.f32.mrb[0].mxu0
      %626 = vmatprep.mubr.bf16.mxu0 0
      %627 = vmatmul.mubr.bf16.gmra.mrb[0].mxu0 %v503
      %v628 = vpop.f32.mrb[0].mxu0
      %v629 = vadd.f32 0.0, %v628
      %v630 = vpop.f32.mrb[0].mxu0
      %v631 = vpop.f32.mrb[0].mxu0
      %v632 = vadd.f32 0.0, %v631
      %v633 = vpop.f32.mrb[0].mxu0
      %634 = vmatprep.mubr.bf16.mxu0 0
      %635 = vmatmul.mubr.bf16.gmra.mrb[0].mxu0 %v506
      %v636 = vpop.f32.mrb[0].mxu0
      %v637 = vadd.f32 0.0, %v636
      %v638 = vpop.f32.mrb[0].mxu0
      %v639 = vpop.f32.mrb[0].mxu0
      %v640 = vadd.f32 0.0, %v639
      %v641 = vpop.f32.mrb[0].mxu0
      %642 = vmatprep.mubr.bf16.mxu0 0
      %643 = vmatmul.mubr.bf16.gmra.mrb[0].mxu0 %v509
      %v644 = vpop.f32.mrb[0].mxu0
      %v645 = vadd.f32 0.0, %v644
      %v646 = vpop.f32.mrb[0].mxu0
      %v647 = vpop.f32.mrb[0].mxu0
      %v648 = vadd.f32 0.0, %v647
      %v649 = vpop.f32.mrb[0].mxu0
      %650 = vmatprep.mubr.bf16.mxu0 0
      %651 = vmatmul.mubr.bf16.gmra.mrb[0].mxu0 %v512
      %v652 = vpop.f32.mrb[0].mxu0
      %v653 = vadd.f32 0.0, %v652
      %v654 = vpop.f32.mrb[0].mxu0
      %v655 = vpop.f32.mrb[0].mxu0
      %v656 = vadd.f32 0.0, %v655
      %v657 = vpop.f32.mrb[0].mxu0
      %658 = vmatprep.mubr.bf16.mxu0 0
      %659 = vmatmul.mubr.bf16.gmra.mrb[0].mxu0 %v515
      %v660 = vpop.f32.mrb[0].mxu0
      %v661 = vadd.f32 0.0, %v660
      %v662 = vpop.f32.mrb[0].mxu0
      %v663 = vpop.f32.mrb[0].mxu0
      %v664 = vadd.f32 0.0, %v663
      %v665 = vpop.f32.mrb[0].mxu0
      %666 = vmatprep.mubr.bf16.mxu0 0
      %667 = vmatmul.mubr.bf16.gmra.mrb[0].mxu0 %v518
      %v668 = vpop.f32.mrb[0].mxu0
      %v669 = vadd.f32 0.0, %v668
      %v670 = vpop.f32.mrb[0].mxu0
      %v671 = vpop.f32.mrb[0].mxu0
      %v672 = vadd.f32 0.0, %v671
      %v673 = vpop.f32.mrb[0].mxu0
      %674 = vmatprep.mubr.bf16.mxu0 0
      %675 = vmatmul.mubr.bf16.gmra.mrb[0].mxu0 %v521
      %v676 = vpop.f32.mrb[0].mxu0
      %v677 = vadd.f32 0.0, %v676
      %v678 = vpop.f32.mrb[0].mxu0
      %v679 = vpop.f32.mrb[0].mxu0
      %v680 = vadd.f32 0.0, %v679
      %v681 = vpop.f32.mrb[0].mxu0
      %682 = vmatprep.mubr.bf16.mxu0 0
      %683 = vmatmul.mubr.bf16.gmra.mrb[0].mxu0 %v524
      %v684 = vpop.f32.mrb[0].mxu0
      %v685 = vadd.f32 0.0, %v684
      %v686 = vpop.f32.mrb[0].mxu0
      %v687 = vpop.f32.mrb[0].mxu0
      %v688 = vadd.f32 0.0, %v687
      %v689 = vpop.f32.mrb[0].mxu0
      %690 = vdwg.mxu0
      %v691 = vadd.f32 %v297, %v565
      %v692 = vadd.f32 %v298, %v568
      %v693 = vadd.f32 %v299, %v573
      %v694 = vadd.f32 %v300, %v576
      %v695 = vadd.f32 %v301, %v581
      %v696 = vadd.f32 %v302, %v584
      %v697 = vadd.f32 %v303, %v589
      %v698 = vadd.f32 %v304, %v592
      %v699 = vadd.f32 %v305, %v597
      %v700 = vadd.f32 %v306, %v600
      %v701 = vadd.f32 %v307, %v605
      %v702 = vadd.f32 %v308, %v608
      %v703 = vadd.f32 %v309, %v613
      %v704 = vadd.f32 %v310, %v616
      %v705 = vadd.f32 %v311, %v621
      %v706 = vadd.f32 %v312, %v624
      %v707 = vadd.f32 %v313, %v629
      %v708 = vadd.f32 %v314, %v632
      %v709 = vadd.f32 %v315, %v637
      %v710 = vadd.f32 %v316, %v640
      %v711 = vadd.f32 %v317, %v645
      %v712 = vadd.f32 %v318, %v648
      %v713 = vadd.f32 %v319, %v653
      %v714 = vadd.f32 %v320, %v656
      %v715 = vadd.f32 %v321, %v661
      %v716 = vadd.f32 %v322, %v664
      %v717 = vadd.f32 %v323, %v669
      %v718 = vadd.f32 %v324, %v672
      %v719 = vadd.f32 %v325, %v677
      %v720 = vadd.f32 %v326, %v680
      %v721 = vadd.f32 %v327, %v685
      %v722 = vadd.f32 %v328, %v688
      %vm723 = vcmask 261120
      %724 = vst.msk [vmem:[#allocation2] sm:$0xff] %vm723, %v691
      %725 = vst.msk [vmem:[#allocation2 + $0x8] sm:$0xff] %vm723, %v692
      %726 = vst.msk [vmem:[#allocation2 + $0x10] sm:$0xff] %vm723, %v693
      %727 = vst.msk [vmem:[#allocation2 + $0x18] sm:$0xff] %vm723, %v694
      %728 = vst.msk [vmem:[#allocation2 + $0x20] sm:$0xff] %vm723, %v695
      %729 = vst.msk [vmem:[#allocation2 + $0x28] sm:$0xff] %vm723, %v696
      %730 = vst.msk [vmem:[#allocation2 + $0x30] sm:$0xff] %vm723, %v697
      %731 = vst.msk [vmem:[#allocation2 + $0x38] sm:$0xff] %vm723, %v698
      %732 = vst.msk [vmem:[#allocation2 + $0x40] sm:$0xff] %vm723, %v699
      %733 = vst.msk [vmem:[#allocation2 + $0x48] sm:$0xff] %vm723, %v700
      %734 = vst.msk [vmem:[#allocation2 + $0x50] sm:$0xff] %vm723, %v701
      %735 = vst.msk [vmem:[#allocation2 + $0x58] sm:$0xff] %vm723, %v702
      %736 = vst.msk [vmem:[#allocation2 + $0x60] sm:$0xff] %vm723, %v703
      %737 = vst.msk [vmem:[#allocation2 + $0x68] sm:$0xff] %vm723, %v704
      %738 = vst.msk [vmem:[#allocation2 + $0x70] sm:$0xff] %vm723, %v705
      %739 = vst.msk [vmem:[#allocation2 + $0x78] sm:$0xff] %vm723, %v706
      %740 = vst.msk [vmem:[#allocation2 + $0x80] sm:$0xff] %vm723, %v707
      %741 = vst.msk [vmem:[#allocation2 + $0x88] sm:$0xff] %vm723, %v708
      %742 = vst.msk [vmem:[#allocation2 + $0x90] sm:$0xff] %vm723, %v709
      %743 = vst.msk [vmem:[#allocation2 + $0x98] sm:$0xff] %vm723, %v710
      %744 = vst.msk [vmem:[#allocation2 + $0xa0] sm:$0xff] %vm723, %v711
      %745 = vst.msk [vmem:[#allocation2 + $0xa8] sm:$0xff] %vm723, %v712
      %746 = vst.msk [vmem:[#allocation2 + $0xb0] sm:$0xff] %vm723, %v713
      %747 = vst.msk [vmem:[#allocation2 + $0xb8] sm:$0xff] %vm723, %v714
      %748 = vst.msk [vmem:[#allocation2 + $0xc0] sm:$0xff] %vm723, %v715
      %749 = vst.msk [vmem:[#allocation2 + $0xc8] sm:$0xff] %vm723, %v716
      %750 = vst.msk [vmem:[#allocation2 + $0xd0] sm:$0xff] %vm723, %v717
      %751 = vst.msk [vmem:[#allocation2 + $0xd8] sm:$0xff] %vm723, %v718
      %752 = vst.msk [vmem:[#allocation2 + $0xe0] sm:$0xff] %vm723, %v719
      %753 = vst.msk [vmem:[#allocation2 + $0xe8] sm:$0xff] %vm723, %v720
      %754 = vst.msk [vmem:[#allocation2 + $0xf0] sm:$0xff] %vm723, %v721
      %755 = vst.msk [vmem:[#allocation2 + $0xf8] sm:$0xff] %vm723, %v722
      // Predicated region
      $region37: #{tpu_custom_call.1} parent=31 // pred_check
        %p756 = pneg %p260
      $region38: #{tpu_custom_call.1} parent=31 // pred_check_branch
        %758 = sbr.rel (%p756) target = $region40
      $region39: #{tpu_custom_call.1} parent=31 // pred_region
        %v759 = vld [vmem:[#allocation2] sm:$0xff]
        %v760 = vld [vmem:[#allocation2 + $0x8] sm:$0xff]
        %v761 = vld [vmem:[#allocation2 + $0x10] sm:$0xff]
        %v762 = vld [vmem:[#allocation2 + $0x18] sm:$0xff]
        %v763 = vld [vmem:[#allocation2 + $0x20] sm:$0xff]
        %v764 = vld [vmem:[#allocation2 + $0x28] sm:$0xff]
        %v765 = vld [vmem:[#allocation2 + $0x30] sm:$0xff]
        %v766 = vld [vmem:[#allocation2 + $0x38] sm:$0xff]
        %v767 = vld [vmem:[#allocation2 + $0x40] sm:$0xff]
        %v768 = vld [vmem:[#allocation2 + $0x48] sm:$0xff]
        %v769 = vld [vmem:[#allocation2 + $0x50] sm:$0xff]
        %v770 = vld [vmem:[#allocation2 + $0x58] sm:$0xff]
        %v771 = vld [vmem:[#allocation2 + $0x60] sm:$0xff]
        %v772 = vld [vmem:[#allocation2 + $0x68] sm:$0xff]
        %v773 = vld [vmem:[#allocation2 + $0x70] sm:$0xff]
        %v774 = vld [vmem:[#allocation2 + $0x78] sm:$0xff]
        %v775 = vld [vmem:[#allocation2 + $0x80] sm:$0xff]
        %v776 = vld [vmem:[#allocation2 + $0x88] sm:$0xff]
        %v777 = vld [vmem:[#allocation2 + $0x90] sm:$0xff]
        %v778 = vld [vmem:[#allocation2 + $0x98] sm:$0xff]
        %v779 = vld [vmem:[#allocation2 + $0xa0] sm:$0xff]
        %v780 = vld [vmem:[#allocation2 + $0xa8] sm:$0xff]
        %v781 = vld [vmem:[#allocation2 + $0xb0] sm:$0xff]
        %v782 = vld [vmem:[#allocation2 + $0xb8] sm:$0xff]
        %v783 = vld [vmem:[#allocation2 + $0xc0] sm:$0xff]
        %v784 = vld [vmem:[#allocation2 + $0xc8] sm:$0xff]
        %v785 = vld [vmem:[#allocation2 + $0xd0] sm:$0xff]
        %v786 = vld [vmem:[#allocation2 + $0xd8] sm:$0xff]
        %v787 = vld [vmem:[#allocation2 + $0xe0] sm:$0xff]
        %v788 = vld [vmem:[#allocation2 + $0xe8] sm:$0xff]
        %v789 = vld [vmem:[#allocation2 + $0xf0] sm:$0xff]
        %v790 = vld [vmem:[#allocation2 + $0xf8] sm:$0xff]
        %v791 = vld [vmem:[%s249] sm:$0x1]
        %v793 = vlaneseq
        %v794 = vshrl.u32 %v793, 7
        %v795 = vsub.s32 0, %v794
        %v796 = vrot.slane %v791, %v795
        %v798 = vadd.f32 %v759, %v796
        %v799 = vadd.f32 %v760, %v796
        %v800 = vadd.f32 %v761, %v796
        %v801 = vadd.f32 %v762, %v796
        %v802 = vadd.f32 %v763, %v796
        %v803 = vadd.f32 %v764, %v796
        %v804 = vadd.f32 %v765, %v796
        %v805 = vadd.f32 %v766, %v796
        %v806 = vadd.f32 %v767, %v796
        %v807 = vadd.f32 %v768, %v796
        %v808 = vadd.f32 %v769, %v796
        %v809 = vadd.f32 %v770, %v796
        %v810 = vadd.f32 %v771, %v796
        %v811 = vadd.f32 %v772, %v796
        %v812 = vadd.f32 %v773, %v796
        %v813 = vadd.f32 %v774, %v796
        %v814 = vadd.f32 %v775, %v796
        %v815 = vadd.f32 %v776, %v796
        %v816 = vadd.f32 %v777, %v796
        %v817 = vadd.f32 %v778, %v796
        %v818 = vadd.f32 %v779, %v796
        %v819 = vadd.f32 %v780, %v796
        %v820 = vadd.f32 %v781, %v796
        %v821 = vadd.f32 %v782, %v796
        %v822 = vadd.f32 %v783, %v796
        %v823 = vadd.f32 %v784, %v796
        %v824 = vadd.f32 %v785, %v796
        %v825 = vadd.f32 %v786, %v796
        %v826 = vadd.f32 %v787, %v796
        %v827 = vadd.f32 %v788, %v796
        %v828 = vadd.f32 %v789, %v796
        %v829 = vadd.f32 %v790, %v796
        %v830 = vmax.f32 %v798, 0.0
        %v831 = vmax.f32 %v799, 0.0
        %v832 = vmax.f32 %v800, 0.0
        %v833 = vmax.f32 %v801, 0.0
        %v834 = vmax.f32 %v802, 0.0
        %v835 = vmax.f32 %v803, 0.0
        %v836 = vmax.f32 %v804, 0.0
        %v837 = vmax.f32 %v805, 0.0
        %v838 = vmax.f32 %v806, 0.0
        %v839 = vmax.f32 %v807, 0.0
        %v840 = vmax.f32 %v808, 0.0
        %v841 = vmax.f32 %v809, 0.0
        %v842 = vmax.f32 %v810, 0.0
        %v843 = vmax.f32 %v811, 0.0
        %v844 = vmax.f32 %v812, 0.0
        %v845 = vmax.f32 %v813, 0.0
        %v846 = vmax.f32 %v814, 0.0
        %v847 = vmax.f32 %v815, 0.0
        %v848 = vmax.f32 %v816, 0.0
        %v849 = vmax.f32 %v817, 0.0
        %v850 = vmax.f32 %v818, 0.0
        %v851 = vmax.f32 %v819, 0.0
        %v852 = vmax.f32 %v820, 0.0
        %v853 = vmax.f32 %v821, 0.0
        %v854 = vmax.f32 %v822, 0.0
        %v855 = vmax.f32 %v823, 0.0
        %v856 = vmax.f32 %v824, 0.0
        %v857 = vmax.f32 %v825, 0.0
        %v858 = vmax.f32 %v826, 0.0
        %v859 = vmax.f32 %v827, 0.0
        %v860 = vmax.f32 %v828, 0.0
        %v861 = vmax.f32 %v829, 0.0
        %v862 = vpack.c.bf16 %v831, %v830
        %v863 = vpack.c.bf16 %v833, %v832
        %v864 = vpack.c.bf16 %v835, %v834
        %v865 = vpack.c.bf16 %v837, %v836
        %v866 = vpack.c.bf16 %v839, %v838
        %v867 = vpack.c.bf16 %v841, %v840
        %v868 = vpack.c.bf16 %v843, %v842
        %v869 = vpack.c.bf16 %v845, %v844
        %v870 = vpack.c.bf16 %v847, %v846
        %v871 = vpack.c.bf16 %v849, %v848
        %v872 = vpack.c.bf16 %v851, %v850
        %v873 = vpack.c.bf16 %v853, %v852
        %v874 = vpack.c.bf16 %v855, %v854
        %v875 = vpack.c.bf16 %v857, %v856
        %v876 = vpack.c.bf16 %v859, %v858
        %v877 = vpack.c.bf16 %v861, %v860
        %v894 = vunpack.c.l.b16 %v862
        %v895 = vunpack.c.h.b16 %v862
        %v896 = vunpack.c.l.b16 %v863
        %v897 = vunpack.c.h.b16 %v863
        %v898 = vunpack.c.l.b16 %v864
        %v899 = vunpack.c.h.b16 %v864
        %v900 = vunpack.c.l.b16 %v865
        %v901 = vunpack.c.h.b16 %v865
        %v902 = vunpack.c.l.b16 %v866
        %v903 = vunpack.c.h.b16 %v866
        %v904 = vunpack.c.l.b16 %v867
        %v905 = vunpack.c.h.b16 %v867
        %v906 = vunpack.c.l.b16 %v868
        %v907 = vunpack.c.h.b16 %v868
        %v908 = vunpack.c.l.b16 %v869
        %v909 = vunpack.c.h.b16 %v869
        %v910 = vunpack.c.l.b16 %v870
        %v911 = vunpack.c.h.b16 %v870
        %v912 = vunpack.c.l.b16 %v871
        %v913 = vunpack.c.h.b16 %v871
        %v914 = vunpack.c.l.b16 %v872
        %v915 = vunpack.c.h.b16 %v872
        %v916 = vunpack.c.l.b16 %v873
        %v917 = vunpack.c.h.b16 %v873
        %v918 = vunpack.c.l.b16 %v874
        %v919 = vunpack.c.h.b16 %v874
        %v920 = vunpack.c.l.b16 %v875
        %v921 = vunpack.c.h.b16 %v875
        %v922 = vunpack.c.l.b16 %v876
        %v923 = vunpack.c.h.b16 %v876
        %v924 = vunpack.c.l.b16 %v877
        %v925 = vunpack.c.h.b16 %v877
        %v926 = vpack.c.b16 %v894, %v894
        %v927 = vpack.c.b16 %v895, %v895
        %v928 = vpack.c.b16 %v896, %v896
        %v929 = vpack.c.b16 %v897, %v897
        %v930 = vpack.c.b16 %v898, %v898
        %v931 = vpack.c.b16 %v899, %v899
        %v932 = vpack.c.b16 %v900, %v900
        %v933 = vpack.c.b16 %v901, %v901
        %v934 = vpack.c.b16 %v902, %v902
        %v935 = vpack.c.b16 %v903, %v903
        %v936 = vpack.c.b16 %v904, %v904
        %v937 = vpack.c.b16 %v905, %v905
        %v938 = vpack.c.b16 %v906, %v906
        %v939 = vpack.c.b16 %v907, %v907
        %v940 = vpack.c.b16 %v908, %v908
        %v941 = vpack.c.b16 %v909, %v909
        %v942 = vpack.c.b16 %v910, %v910
        %v943 = vpack.c.b16 %v911, %v911
        %v944 = vpack.c.b16 %v912, %v912
        %v945 = vpack.c.b16 %v913, %v913
        %v946 = vpack.c.b16 %v914, %v914
        %v947 = vpack.c.b16 %v915, %v915
        %v948 = vpack.c.b16 %v916, %v916
        %v949 = vpack.c.b16 %v917, %v917
        %v950 = vpack.c.b16 %v918, %v918
        %v951 = vpack.c.b16 %v919, %v919
        %v952 = vpack.c.b16 %v920, %v920
        %v953 = vpack.c.b16 %v921, %v921
        %v954 = vpack.c.b16 %v922, %v922
        %v955 = vpack.c.b16 %v923, %v923
        %v956 = vpack.c.b16 %v924, %v924
        %v957 = vpack.c.b16 %v925, %v925
        %vm990 = vcmask 257024
        %991 = vst.msk [vmem:[%s257] sm:$0xf] %vm990, %v926
        %992 = vst.msk [vmem:[%s257 + $0x4] sm:$0xf] %vm990, %v927
        %993 = vst.msk [vmem:[%s257 + $0x8] sm:$0xf] %vm990, %v928
        %994 = vst.msk [vmem:[%s257 + $0xc] sm:$0xf] %vm990, %v929
        %995 = vst.msk [vmem:[%s257 + $0x10] sm:$0xf] %vm990, %v930
        %996 = vst.msk [vmem:[%s257 + $0x14] sm:$0xf] %vm990, %v931
        %997 = vst.msk [vmem:[%s257 + $0x18] sm:$0xf] %vm990, %v932
        %998 = vst.msk [vmem:[%s257 + $0x1c] sm:$0xf] %vm990, %v933
        %999 = vst.msk [vmem:[%s257 + $0x20] sm:$0xf] %vm990, %v934
        %1000 = vst.msk [vmem:[%s257 + $0x24] sm:$0xf] %vm990, %v935
        %1001 = vst.msk [vmem:[%s257 + $0x28] sm:$0xf] %vm990, %v936
        %1002 = vst.msk [vmem:[%s257 + $0x2c] sm:$0xf] %vm990, %v937
        %1003 = vst.msk [vmem:[%s257 + $0x30] sm:$0xf] %vm990, %v938
        %1004 = vst.msk [vmem:[%s257 + $0x34] sm:$0xf] %vm990, %v939
        %1005 = vst.msk [vmem:[%s257 + $0x38] sm:$0xf] %vm990, %v940
        %1006 = vst.msk [vmem:[%s257 + $0x3c] sm:$0xf] %vm990, %v941
        %1007 = vst.msk [vmem:[%s257 + $0x40] sm:$0xf] %vm990, %v942
        %1008 = vst.msk [vmem:[%s257 + $0x44] sm:$0xf] %vm990, %v943
        %1009 = vst.msk [vmem:[%s257 + $0x48] sm:$0xf] %vm990, %v944
        %1010 = vst.msk [vmem:[%s257 + $0x4c] sm:$0xf] %vm990, %v945
        %1011 = vst.msk [vmem:[%s257 + $0x50] sm:$0xf] %vm990, %v946
        %1012 = vst.msk [vmem:[%s257 + $0x54] sm:$0xf] %vm990, %v947
        %1013 = vst.msk [vmem:[%s257 + $0x58] sm:$0xf] %vm990, %v948
        %1014 = vst.msk [vmem:[%s257 + $0x5c] sm:$0xf] %vm990, %v949
        %1015 = vst.msk [vmem:[%s257 + $0x60] sm:$0xf] %vm990, %v950
        %1016 = vst.msk [vmem:[%s257 + $0x64] sm:$0xf] %vm990, %v951
        %1017 = vst.msk [vmem:[%s257 + $0x68] sm:$0xf] %vm990, %v952
        %1018 = vst.msk [vmem:[%s257 + $0x6c] sm:$0xf] %vm990, %v953
        %1019 = vst.msk [vmem:[%s257 + $0x70] sm:$0xf] %vm990, %v954
        %1020 = vst.msk [vmem:[%s257 + $0x74] sm:$0xf] %vm990, %v955
        %1021 = vst.msk [vmem:[%s257 + $0x78] sm:$0xf] %vm990, %v956
        %1022 = vst.msk [vmem:[%s257 + $0x7c] sm:$0xf] %vm990, %v957
      $region40: #{tpu_custom_call.1} parent=31 // pred_fallthru
        _
      %s1023 = smul.u32 32, %s19
      %p1024 = scmp.lt.s32.totalorder %s1023, 63
      %s1025 = scalar_select %p1024, %s1023, 63
      %p1026 = scmp.lt.s32.totalorder %s20, 0
      %s1027 = scalar_select %p1026, %s20, 0
      %s1028 = sadd.s32 %s1027, %s1025
      %s1029 = smul.addr %s1028, 4
      %s1030 = scalar_lea.vmem %s3, %s1029
      // Predicated region
      $region41: #{tpu_custom_call.1} parent=31 // pred_check
        %p1031 = pneg %p135
      $region42: #{tpu_custom_call.1} parent=31 // pred_check_branch
        %1033 = sbr.rel (%p1031) target = $region44
      $region43: #{tpu_custom_call.1} parent=31 // pred_region
        %s1034 = smul.u32 32, %s19
      $region44: #{tpu_custom_call.1} parent=31 // pred_fallthru
        _
    $region32: #{tpu_custom_call.1} parent=5 // pred_fallthru
      _
    %p1035 = scmp.le.s32.totalorder 2, %s9
    // Predicated region
    $region45: #{tpu_custom_call.1} parent=5 // pred_check
      %p1036 = pneg %p1035
    $region46: #{tpu_custom_call.1} parent=5 // pred_check_branch
      %1038 = sbr.rel (%p1036) target = $region48
    $region47: #{tpu_custom_call.1} parent=5 // pred_region
      %s1039 = ssub.s32 %s9, 2
      // Predicated region
      $region49: #{tpu_custom_call.1} parent=47 // pred_check
        %p1040 = pneg %p141
      $region50: #{tpu_custom_call.1} parent=47 // pred_check_branch
        %1042 = sbr.rel (%p1040) target = $region52
      $region51: #{tpu_custom_call.1} parent=47 // pred_region
        %s1043 = smul.u32 32, %s22
        %p1044 = scmp.lt.s32.totalorder %s1043, 63
        %s1045 = scalar_select %p1044, %s1043, 63
        %p1046 = scmp.lt.s32.totalorder %s23, 0
        %s1047 = scalar_select %p1046, %s23, 0
        %s1048 = sadd.s32 %s1047, %s1045
        %s1049 = smul.addr %s1048, 4
        %s1050 = scalar_lea.vmem %s3, %s1049
      $region52: #{tpu_custom_call.1} parent=47 // pred_fallthru
        _
    $region48: #{tpu_custom_call.1} parent=5 // pred_fallthru
      _
  $region6: #{tpu_custom_call.1} parent=0 // loop_footer
    %s13 = sadd.s32 1, %s9
  $region7: #{tpu_custom_call.1} parent=0 // loop_footer_branch
    %8 = sbr.rel target = $region3
  $region8: #{tpu_custom_call.1} parent=0 // loop_exit
    _

</llo_original>
